<compile_context>
chip_gen: v6e
topology: v6e:2x2x1
jax: 0.10.0
libtpu: 0.0.40
codegen_flags: <defaults>
</compile_context>

<pallas_src>
import jax
import jax.numpy as jnp
from jax.experimental import pallas as pl
from jax.experimental.pallas import tpu as pltpu

_EPS = 1e-5
_LANES = 128
_MAX_TR = 1024  # sublane-row groups per tile: (3+4) planes * 1024 * 128 * 4B ~= 3.5 MiB


def _cdiv(a, b):
    return -(-a // b)


def _round_up(a, b):
    return ((a + b - 1) // b) * b


def _fused_kernel(w_ref, b_ref, g2_ref, beta_ref, x_ref, o_ref):
    """Linear(3->4) + LayerNorm(4) + tanh on feature-major planes.

    w_ref:    (12,) f32 SMEM   pre-centered W, row-major [out, in]
    b_ref:    (4,)  f32 SMEM   pre-centered bias
    g2_ref:   (4,)  f32 SMEM   2 * LayerNorm weight
    beta_ref: (4,)  f32 SMEM   LayerNorm bias
    x_ref:    (3, TR, 128) f32 VMEM   input feature planes
    o_ref:    (4, TR, 128) f32 VMEM   output feature planes
    """
    x0 = x_ref[0]
    x1 = x_ref[1]
    x2 = x_ref[2]

    # Linear with pre-centered params: y[j] is already (y - mean_j(y)) of the
    # original Linear output, so LayerNorm only needs the second moment.
    y = [
        w_ref[3 * j] * x0 + w_ref[3 * j + 1] * x1 + w_ref[3 * j + 2] * x2 + b_ref[j]
        for j in range(4)
    ]

    # rsqrt(var + eps) * gamma  ==  rsqrt(ss + 4*eps) * (2*gamma); the 2x is folded
    # into g2 by the wrapper, eps folding saves a VPU mul in the hot loop.
    ss = y[0] * y[0] + y[1] * y[1] + y[2] * y[2] + y[3] * y[3]
    inv = jax.lax.rsqrt(ss + 4.0 * _EPS)  # EUP slot, effectively free

    for j in range(4):
        o_ref[j] = jnp.tanh(y[j] * (inv * g2_ref[j]) + beta_ref[j])


def model_forward(x, w, b, gamma, beta):
    """x: (B, S, 3).  Returns flattened (B*3S*4,) f32, matching the PyTorch module."""
    B, S, F = x.shape
    assert F == 3
    M = B * S

    x = x.astype(jnp.float32)  # explicit, in case callers pass bf16

    # --- parameter prep (constant folding, once, outside the kernel) ---
    wc = (w - jnp.mean(w, axis=0, keepdims=True)).reshape(-1).astype(jnp.float32)  # (12,)
    bc = (b - jnp.mean(b)).astype(jnp.float32)                                     # (4,)
    g2 = (2.0 * gamma).astype(jnp.float32)                                         # (4,)
    bt = beta.astype(jnp.float32)                                                  # (4,)

    # --- row grouping: only round to the (8,128) layout granule, no tile over-round ---
    rgroups = _round_up(_cdiv(M, _LANES), 8)
    if rgroups > 8:
        # >=2 grid steps whenever possible so v7x's two TensorCores both get work.
        tr = min(_MAX_TR, _round_up(_cdiv(rgroups, 2), 8))
    else:
        tr = rgroups
    nsteps = _cdiv(rgroups, tr)  # Pallas pads/masks the partial last block
    mpad = rgroups * _LANES

    # --- feature-major, lane-dense layout: (3, rgroups, 128) ---
    # Pad rows first so XLA emits a single pad+transpose+reshape copy fusion.
    x2d = x.reshape(M, 3)
    x2d = jnp.pad(x2d, ((0, mpad - M), (0, 0)))
    xt = x2d.T.reshape(3, rgroups, _LANES)

    smem_spec = lambda: pl.BlockSpec(memory_space=pltpu.MemorySpace.SMEM)

    out = pl.pallas_call(
        _fused_kernel,
        out_shape=jax.ShapeDtypeStruct((4, rgroups, _LANES), jnp.float32),
        grid=(nsteps,),
        in_specs=[
            smem_spec(),  # wc
            smem_spec(),  # bc
            smem_spec(),  # g2
            smem_spec(),  # beta
            pl.BlockSpec((3, tr, _LANES), lambda i: (0, i, 0)),
        ],
        out_specs=pl.BlockSpec((4, tr, _LANES), lambda i: (0, i, 0)),
        compiler_params=pltpu.CompilerParams(
            dimension_semantics=("parallel",),
        ),
    )(wc, bc, g2, bt, xt)

    # --- back to torch layout: cat([f(x)]*3, dim=1) then .view(-1) ---
    # slice + transpose + broadcast + flatten, written broadcast-style (not tile/concat)
    # so XLA can keep the replica expansion in a single output fusion.
    y = out.reshape(4, mpad)[:, :M]            # (4, M) feature-major, unique rows
    y = y.T.reshape(B, 1, S, 4)                # (B, 1, S, 4) row-major unique result
    y3 = jnp.broadcast_to(y, (B, 3, S, 4))     # == torch.cat([.,.,.], dim=1)
    return y3.reshape(-1)


def _ref_forward(x, w, b, g, beta):
    """Pure-JAX reference of the PyTorch forward (with the materialized concat)."""
    x = x.astype(jnp.float32)
    y = jnp.concatenate([x, x, x], axis=1)
    y = y @ w.T + b
    mu = jnp.mean(y, axis=-1, keepdims=True)
    var = jnp.mean((y - mu) ** 2, axis=-1, keepdims=True)
    yn = (y - mu) * jax.lax.rsqrt(var + _EPS) * g + beta
    return jnp.tanh(yn).reshape(-1)


if __name__ == "__main__":
    key = jax.random.PRNGKey(0)
    kx, kw, kb, kx2 = jax.random.split(key, 4)

    # Deterministic parameter init (PyTorch Linear default: U(-1/sqrt(in), 1/sqrt(in)))
    bound = 1.0 / (3.0 ** 0.5)
    w = jax.random.uniform(kw, (4, 3), minval=-bound, maxval=bound, dtype=jnp.float32)
    b = jax.random.uniform(kb, (4,), minval=-bound, maxval=bound, dtype=jnp.float32)
    gamma = jnp.ones((4,), dtype=jnp.float32)   # LayerNorm weight
    beta = jnp.zeros((4,), dtype=jnp.float32)   # LayerNorm bias

    fwd = jax.jit(model_forward)

    # Case 1: small shape consistent with the forward (last dim must be 3 for Linear(3,4)).
    B1, S1 = 2, 8
    x1 = jax.random.normal(kx, (B1, S1, 3), dtype=jnp.float32)
    out1 = jax.block_until_ready(fwd(x1, w, b, gamma, beta))
    exp1 = _ref_forward(x1, w, b, gamma, beta)
    assert out1.shape == (B1 * 3 * S1 * 4,)
    assert jnp.allclose(out1, exp1, atol=1e-4, rtol=1e-4)

    # Case 2: rows that do not divide the tile -> exercises multi-step grid with a
    # partial last block (no over-padding to a full tile).
    B2, S2 = 3, 700
    x2 = jax.random.normal(kx2, (B2, S2, 3), dtype=jnp.float32)
    out2 = jax.block_until_ready(fwd(x2, w, b, gamma, beta))
    exp2 = _ref_forward(x2, w, b, gamma, beta)
    assert out2.shape == (B2 * 3 * S2 * 4,)
    assert jnp.allclose(out2, exp2, atol=1e-4, rtol=1e-4)

    print("KERNEL_OK")
</pallas_src>

<mosaic_0001>
module attributes {stable_mosaic.version = 11 : i64} {
  func.func @_fused_kernel(%arg0: i32, %arg1: memref<12xf32, #tpu.memory_space<smem>>, %arg2: memref<4xf32, #tpu.memory_space<smem>>, %arg3: memref<4xf32, #tpu.memory_space<smem>>, %arg4: memref<4xf32, #tpu.memory_space<smem>>, %arg5: memref<3x8x128xf32, #tpu.memory_space<vmem>>, %arg6: memref<4x8x128xf32, #tpu.memory_space<vmem>>) attributes {dimension_semantics = [#tpu.dimension_semantics<parallel>], iteration_bounds = array<i64: 1>, scalar_prefetch = 0 : i64, scratch_operands = 0 : i64, tpu.core_type = #tpu.core_type<tc>, window_params = [{transform_indices = @transform_0, window_bounds = array<i64: 12>}, {transform_indices = @transform_1, window_bounds = array<i64: 4>}, {transform_indices = @transform_2, window_bounds = array<i64: 4>}, {transform_indices = @transform_3, window_bounds = array<i64: 4>}, {transform_indices = @transform_4, window_bounds = array<i64: 3, 8, 128>}, {transform_indices = @transform_5, window_bounds = array<i64: 4, 8, 128>}]} {
    %c0 = arith.constant 0 : index
    %c0_0 = arith.constant 0 : index
    %c0_1 = arith.constant 0 : index
    %0 = vector.load %arg5[%c0, %c0_0, %c0_1] : memref<3x8x128xf32, #tpu.memory_space<vmem>>, vector<1x8x128xf32>
    %1 = vector.shape_cast %0 : vector<1x8x128xf32> to vector<8x128xf32>
    %c1 = arith.constant 1 : index
    %c0_2 = arith.constant 0 : index
    %c0_3 = arith.constant 0 : index
    %2 = vector.load %arg5[%c1, %c0_2, %c0_3] : memref<3x8x128xf32, #tpu.memory_space<vmem>>, vector<1x8x128xf32>
    %3 = vector.shape_cast %2 : vector<1x8x128xf32> to vector<8x128xf32>
    %c2 = arith.constant 2 : index
    %c0_4 = arith.constant 0 : index
    %c0_5 = arith.constant 0 : index
    %4 = vector.load %arg5[%c2, %c0_4, %c0_5] : memref<3x8x128xf32, #tpu.memory_space<vmem>>, vector<1x8x128xf32>
    %5 = vector.shape_cast %4 : vector<1x8x128xf32> to vector<8x128xf32>
    %c0_6 = arith.constant 0 : index
    %6 = memref.load %arg1[%c0_6] : memref<12xf32, #tpu.memory_space<smem>>
    %7 = vector.broadcast %6 : f32 to vector<8x128xf32>
    %8 = arith.mulf %7, %1 : vector<8x128xf32>
    %c1_7 = arith.constant 1 : index
    %9 = memref.load %arg1[%c1_7] : memref<12xf32, #tpu.memory_space<smem>>
    %10 = vector.broadcast %9 : f32 to vector<8x128xf32>
    %11 = arith.mulf %10, %3 : vector<8x128xf32>
    %12 = arith.addf %8, %11 : vector<8x128xf32>
    %c2_8 = arith.constant 2 : index
    %13 = memref.load %arg1[%c2_8] : memref<12xf32, #tpu.memory_space<smem>>
    %14 = vector.broadcast %13 : f32 to vector<8x128xf32>
    %15 = arith.mulf %14, %5 : vector<8x128xf32>
    %16 = arith.addf %12, %15 : vector<8x128xf32>
    %c0_9 = arith.constant 0 : index
    %17 = memref.load %arg2[%c0_9] : memref<4xf32, #tpu.memory_space<smem>>
    %18 = vector.broadcast %17 : f32 to vector<8x128xf32>
    %19 = arith.addf %16, %18 : vector<8x128xf32>
    %c3 = arith.constant 3 : index
    %20 = memref.load %arg1[%c3] : memref<12xf32, #tpu.memory_space<smem>>
    %21 = vector.broadcast %20 : f32 to vector<8x128xf32>
    %22 = arith.mulf %21, %1 : vector<8x128xf32>
    %c4 = arith.constant 4 : index
    %23 = memref.load %arg1[%c4] : memref<12xf32, #tpu.memory_space<smem>>
    %24 = vector.broadcast %23 : f32 to vector<8x128xf32>
    %25 = arith.mulf %24, %3 : vector<8x128xf32>
    %26 = arith.addf %22, %25 : vector<8x128xf32>
    %c5 = arith.constant 5 : index
    %27 = memref.load %arg1[%c5] : memref<12xf32, #tpu.memory_space<smem>>
    %28 = vector.broadcast %27 : f32 to vector<8x128xf32>
    %29 = arith.mulf %28, %5 : vector<8x128xf32>
    %30 = arith.addf %26, %29 : vector<8x128xf32>
    %c1_10 = arith.constant 1 : index
    %31 = memref.load %arg2[%c1_10] : memref<4xf32, #tpu.memory_space<smem>>
    %32 = vector.broadcast %31 : f32 to vector<8x128xf32>
    %33 = arith.addf %30, %32 : vector<8x128xf32>
    %c6 = arith.constant 6 : index
    %34 = memref.load %arg1[%c6] : memref<12xf32, #tpu.memory_space<smem>>
    %35 = vector.broadcast %34 : f32 to vector<8x128xf32>
    %36 = arith.mulf %35, %1 : vector<8x128xf32>
    %c7 = arith.constant 7 : index
    %37 = memref.load %arg1[%c7] : memref<12xf32, #tpu.memory_space<smem>>
    %38 = vector.broadcast %37 : f32 to vector<8x128xf32>
    %39 = arith.mulf %38, %3 : vector<8x128xf32>
    %40 = arith.addf %36, %39 : vector<8x128xf32>
    %c8 = arith.constant 8 : index
    %41 = memref.load %arg1[%c8] : memref<12xf32, #tpu.memory_space<smem>>
    %42 = vector.broadcast %41 : f32 to vector<8x128xf32>
    %43 = arith.mulf %42, %5 : vector<8x128xf32>
    %44 = arith.addf %40, %43 : vector<8x128xf32>
    %c2_11 = arith.constant 2 : index
    %45 = memref.load %arg2[%c2_11] : memref<4xf32, #tpu.memory_space<smem>>
    %46 = vector.broadcast %45 : f32 to vector<8x128xf32>
    %47 = arith.addf %44, %46 : vector<8x128xf32>
    %c9 = arith.constant 9 : index
    %48 = memref.load %arg1[%c9] : memref<12xf32, #tpu.memory_space<smem>>
    %49 = vector.broadcast %48 : f32 to vector<8x128xf32>
    %50 = arith.mulf %49, %1 : vector<8x128xf32>
    %c10 = arith.constant 10 : index
    %51 = memref.load %arg1[%c10] : memref<12xf32, #tpu.memory_space<smem>>
    %52 = vector.broadcast %51 : f32 to vector<8x128xf32>
    %53 = arith.mulf %52, %3 : vector<8x128xf32>
    %54 = arith.addf %50, %53 : vector<8x128xf32>
    %c11 = arith.constant 11 : index
    %55 = memref.load %arg1[%c11] : memref<12xf32, #tpu.memory_space<smem>>
    %56 = vector.broadcast %55 : f32 to vector<8x128xf32>
    %57 = arith.mulf %56, %5 : vector<8x128xf32>
    %58 = arith.addf %54, %57 : vector<8x128xf32>
    %c3_12 = arith.constant 3 : index
    %59 = memref.load %arg2[%c3_12] : memref<4xf32, #tpu.memory_space<smem>>
    %60 = vector.broadcast %59 : f32 to vector<8x128xf32>
    %61 = arith.addf %58, %60 : vector<8x128xf32>
    %62 = arith.mulf %19, %19 : vector<8x128xf32>
    %63 = arith.mulf %33, %33 : vector<8x128xf32>
    %64 = arith.addf %62, %63 : vector<8x128xf32>
    %65 = arith.mulf %47, %47 : vector<8x128xf32>
    %66 = arith.addf %64, %65 : vector<8x128xf32>
    %67 = arith.mulf %61, %61 : vector<8x128xf32>
    %68 = arith.addf %66, %67 : vector<8x128xf32>
    %cst = arith.constant 4.000000e-05 : f32
    %69 = vector.broadcast %cst : f32 to vector<8x128xf32>
    %70 = arith.addf %68, %69 : vector<8x128xf32>
    %71 = math.rsqrt %70 : vector<8x128xf32>
    %c0_13 = arith.constant 0 : index
    %72 = memref.load %arg3[%c0_13] : memref<4xf32, #tpu.memory_space<smem>>
    %73 = vector.broadcast %72 : f32 to vector<8x128xf32>
    %74 = arith.mulf %71, %73 : vector<8x128xf32>
    %75 = arith.mulf %19, %74 : vector<8x128xf32>
    %c0_14 = arith.constant 0 : index
    %76 = memref.load %arg4[%c0_14] : memref<4xf32, #tpu.memory_space<smem>>
    %77 = vector.broadcast %76 : f32 to vector<8x128xf32>
    %78 = arith.addf %75, %77 : vector<8x128xf32>
    %79 = math.tanh %78 : vector<8x128xf32>
    %c0_15 = arith.constant 0 : index
    %c0_16 = arith.constant 0 : index
    %c0_17 = arith.constant 0 : index
    %80 = vector.load %arg6[%c0_15, %c0_16, %c0_17] : memref<4x8x128xf32, #tpu.memory_space<vmem>>, vector<1x8x128xf32>
    %81 = vector.shape_cast %80 : vector<1x8x128xf32> to vector<8x128xf32>
    %82 = vector.shape_cast %79 : vector<8x128xf32> to vector<1x8x128xf32>
    tpu.vector_store %arg6[%c0_15, %c0_16, %c0_17], %82 {strides = array<i32>} : memref<4x8x128xf32, #tpu.memory_space<vmem>>, vector<1x8x128xf32>,
    %c1_18 = arith.constant 1 : index
    %83 = memref.load %arg3[%c1_18] : memref<4xf32, #tpu.memory_space<smem>>
    %84 = vector.broadcast %83 : f32 to vector<8x128xf32>
    %85 = arith.mulf %71, %84 : vector<8x128xf32>
    %86 = arith.mulf %33, %85 : vector<8x128xf32>
    %c1_19 = arith.constant 1 : index
    %87 = memref.load %arg4[%c1_19] : memref<4xf32, #tpu.memory_space<smem>>
    %88 = vector.broadcast %87 : f32 to vector<8x128xf32>
    %89 = arith.addf %86, %88 : vector<8x128xf32>
    %90 = math.tanh %89 : vector<8x128xf32>
    %c1_20 = arith.constant 1 : index
    %c0_21 = arith.constant 0 : index
    %c0_22 = arith.constant 0 : index
    %91 = vector.load %arg6[%c1_20, %c0_21, %c0_22] : memref<4x8x128xf32, #tpu.memory_space<vmem>>, vector<1x8x128xf32>
    %92 = vector.shape_cast %91 : vector<1x8x128xf32> to vector<8x128xf32>
    %93 = vector.shape_cast %90 : vector<8x128xf32> to vector<1x8x128xf32>
    tpu.vector_store %arg6[%c1_20, %c0_21, %c0_22], %93 {strides = array<i32>} : memref<4x8x128xf32, #tpu.memory_space<vmem>>, vector<1x8x128xf32>,
    %c2_23 = arith.constant 2 : index
    %94 = memref.load %arg3[%c2_23] : memref<4xf32, #tpu.memory_space<smem>>
    %95 = vector.broadcast %94 : f32 to vector<8x128xf32>
    %96 = arith.mulf %71, %95 : vector<8x128xf32>
    %97 = arith.mulf %47, %96 : vector<8x128xf32>
    %c2_24 = arith.constant 2 : index
    %98 = memref.load %arg4[%c2_24] : memref<4xf32, #tpu.memory_space<smem>>
    %99 = vector.broadcast %98 : f32 to vector<8x128xf32>
    %100 = arith.addf %97, %99 : vector<8x128xf32>
    %101 = math.tanh %100 : vector<8x128xf32>
    %c2_25 = arith.constant 2 : index
    %c0_26 = arith.constant 0 : index
    %c0_27 = arith.constant 0 : index
    %102 = vector.load %arg6[%c2_25, %c0_26, %c0_27] : memref<4x8x128xf32, #tpu.memory_space<vmem>>, vector<1x8x128xf32>
    %103 = vector.shape_cast %102 : vector<1x8x128xf32> to vector<8x128xf32>
    %104 = vector.shape_cast %101 : vector<8x128xf32> to vector<1x8x128xf32>
    tpu.vector_store %arg6[%c2_25, %c0_26, %c0_27], %104 {strides = array<i32>} : memref<4x8x128xf32, #tpu.memory_space<vmem>>, vector<1x8x128xf32>,
    %c3_28 = arith.constant 3 : index
    %105 = memref.load %arg3[%c3_28] : memref<4xf32, #tpu.memory_space<smem>>
    %106 = vector.broadcast %105 : f32 to vector<8x128xf32>
    %107 = arith.mulf %71, %106 : vector<8x128xf32>
    %108 = arith.mulf %61, %107 : vector<8x128xf32>
    %c3_29 = arith.constant 3 : index
    %109 = memref.load %arg4[%c3_29] : memref<4xf32, #tpu.memory_space<smem>>
    %110 = vector.broadcast %109 : f32 to vector<8x128xf32>
    %111 = arith.addf %108, %110 : vector<8x128xf32>
    %112 = math.tanh %111 : vector<8x128xf32>
    %c3_30 = arith.constant 3 : index
    %c0_31 = arith.constant 0 : index
    %c0_32 = arith.constant 0 : index
    %113 = vector.load %arg6[%c3_30, %c0_31, %c0_32] : memref<4x8x128xf32, #tpu.memory_space<vmem>>, vector<1x8x128xf32>
    %114 = vector.shape_cast %113 : vector<1x8x128xf32> to vector<8x128xf32>
    %115 = vector.shape_cast %112 : vector<8x128xf32> to vector<1x8x128xf32>
    tpu.vector_store %arg6[%c3_30, %c0_31, %c0_32], %115 {strides = array<i32>} : memref<4x8x128xf32, #tpu.memory_space<vmem>>, vector<1x8x128xf32>,
    return
  }
  func.func @transform_0(%arg0: i32) -> i32 {
    %c0_i32 = arith.constant 0 : i32
    %c0_i32_0 = arith.constant 0 : i32
    return %c0_i32 : i32
  }
  func.func @transform_1(%arg0: i32) -> i32 {
    %c0_i32 = arith.constant 0 : i32
    %c0_i32_0 = arith.constant 0 : i32
    return %c0_i32 : i32
  }
  func.func @transform_2(%arg0: i32) -> i32 {
    %c0_i32 = arith.constant 0 : i32
    %c0_i32_0 = arith.constant 0 : i32
    return %c0_i32 : i32
  }
  func.func @transform_3(%arg0: i32) -> i32 {
    %c0_i32 = arith.constant 0 : i32
    %c0_i32_0 = arith.constant 0 : i32
    return %c0_i32 : i32
  }
  func.func @transform_4(%arg0: i32) -> (i32, i32, i32) {
    %c0_i32 = arith.constant 0 : i32
    %c0_i32_0 = arith.constant 0 : i32
    %c0_i32_1 = arith.constant 0 : i32
    return %c0_i32, %arg0, %c0_i32_0 : i32, i32, i32
  }
  func.func @transform_5(%arg0: i32) -> (i32, i32, i32) {
    %c0_i32 = arith.constant 0 : i32
    %c0_i32_0 = arith.constant 0 : i32
    %c0_i32_1 = arith.constant 0 : i32
    return %c0_i32, %arg0, %c0_i32_0 : i32, i32, i32
  }
}

</mosaic_0001>

<llo_original>
// kernel: model_forward.1
$region0: #{model_forward.1}
  #allocation0 [shape = 'u32[]', space=smem, size = 0x4, offset = 0x4, fixed_abs, tag = 'smem constant byte address 0x4 - core index']
  #allocation1 [shape = 'u32[144,128]{1,0:T(1,128)}', space=vmem, size = 0x12000, scoped, tag = 'internal scratch']
  %s0 = inlined_call_operand.vmem [shape: f32[12], index: 0, kind: input, shape index: {}]
  %s1 = inlined_call_operand.vmem [shape: f32[4], index: 1, kind: input, shape index: {}]
  %s2 = inlined_call_operand.vmem [shape: f32[4], index: 2, kind: input, shape index: {}]
  %s3 = inlined_call_operand.vmem [shape: f32[4], index: 3, kind: input, shape index: {}]
  %s4 = inlined_call_operand.vmem [shape: f32[3,8,128], index: 4, kind: input, shape index: {}]
  %s5 = inlined_call_operand.vmem [shape: f32[4,8,128], index: 5, kind: output, shape index: {}]
  %s6 = sld [smem:[#allocation0]]
  $region46: #{model_forward.1} parent=0
    _
  %s8 = ssub.s32 1, %s6
  %s9 = scalar_select 0, %s8, %s6
  $region1: #{model_forward.1} parent=0
    #allocation2 [shape = 'u8[512]{0}', space=smem, size = 0x200, scoped, tag = 'input window, operand 0, single buffered']
    #allocation3 [shape = 's32[1]{0}', space=sflag, size = 0x4, scoped, tag = 'scoped memory for model_forward.1']
    #allocation4 [shape = 'u8[512]{0}', space=smem, size = 0x200, scoped, tag = 'input window, operand 1, single buffered']
    #allocation5 [shape = 's32[1]{0}', space=sflag, size = 0x4, scoped, tag = 'scoped memory for model_forward.1']
    #allocation6 [shape = 'u8[512]{0}', space=smem, size = 0x200, scoped, tag = 'input window, operand 2, single buffered']
    #allocation7 [shape = 'u8[512]{0}', space=smem, size = 0x200, scoped, tag = 'input window, operand 3, single buffered']
    #allocation8 [shape = 's32[1]{0}', space=sflag, size = 0x4, scoped, tag = 'scoped memory for model_forward.1']
    %10 = vsyncpa [#allocation3], 0
    %11 = vsyncpa [#allocation5], 0
    %12 = vsyncpa [#allocation8], 0
    // Predicated region
    $region2: #{model_forward.1} parent=1 // pred_check
      _
    $region3: #{model_forward.1} parent=1 // pred_check_branch
      %14 = sbr.rel (0) target = $region5
    $region4: #{model_forward.1} parent=1 // pred_region
      %s16 = ssub.s32 16, 16
      %17 = vsyncadd [#allocation3], %s16
      %s19 = sshll.u32 %s0, 4
      %s20 = int_to_ptr.vmem [resolvable:$true] %s19
      %22 = dma.vmem_to_smem %s20, 16, [#allocation2], [#allocation3]
    $region5: #{model_forward.1} parent=1 // pred_fallthru
      _
    // Predicated region
    $region6: #{model_forward.1} parent=1 // pred_check
      _
    $region7: #{model_forward.1} parent=1 // pred_check_branch
      %24 = sbr.rel (0) target = $region9
    $region8: #{model_forward.1} parent=1 // pred_region
      %s26 = ssub.s32 16, 16
      %27 = vsyncadd [#allocation5], %s26
      %s29 = sshll.u32 %s1, 4
      %s30 = int_to_ptr.vmem [resolvable:$true] %s29
      %32 = dma.vmem_to_smem %s30, 16, [#allocation4], [#allocation5]
    $region9: #{model_forward.1} parent=1 // pred_fallthru
      _
    // Predicated region
    $region10: #{model_forward.1} parent=1 // pred_check
      _
    $region11: #{model_forward.1} parent=1 // pred_check_branch
      %34 = sbr.rel (0) target = $region13
    $region12: #{model_forward.1} parent=1 // pred_region
      %s36 = ssub.s32 16, 16
      %37 = vsyncadd [#allocation5], %s36
      %s39 = sshll.u32 %s2, 4
      %s40 = int_to_ptr.vmem [resolvable:$true] %s39
      %42 = dma.vmem_to_smem %s40, 16, [#allocation6], [#allocation5]
    $region13: #{model_forward.1} parent=1 // pred_fallthru
      _
    // Predicated region
    $region14: #{model_forward.1} parent=1 // pred_check
      _
    $region15: #{model_forward.1} parent=1 // pred_check_branch
      %44 = sbr.rel (0) target = $region17
    $region16: #{model_forward.1} parent=1 // pred_region
      %s46 = ssub.s32 16, 16
      %47 = vsyncadd [#allocation8], %s46
      %s49 = sshll.u32 %s3, 4
      %s50 = int_to_ptr.vmem [resolvable:$true] %s49
      %52 = dma.vmem_to_smem %s50, 16, [#allocation7], [#allocation8]
    $region17: #{model_forward.1} parent=1 // pred_fallthru
      _
    // Predicated region
    $region18: #{model_forward.1} parent=1 // pred_check
      _
    $region19: #{model_forward.1} parent=1 // pred_check_branch
      %54 = sbr.rel (0) target = $region21
    $region20: #{model_forward.1} parent=1 // pred_region
      _
    $region21: #{model_forward.1} parent=1 // pred_fallthru
      _
    // Predicated region
    $region22: #{model_forward.1} parent=1 // pred_check
      _
    $region23: #{model_forward.1} parent=1 // pred_check_branch
      %56 = sbr.rel (0) target = $region25
    $region24: #{model_forward.1} parent=1 // pred_region
      %57 = dma.done [#allocation3], 16
    $region25: #{model_forward.1} parent=1 // pred_fallthru
      _
    // Predicated region
    $region26: #{model_forward.1} parent=1 // pred_check
      _
    $region27: #{model_forward.1} parent=1 // pred_check_branch
      %59 = sbr.rel (0) target = $region29
    $region28: #{model_forward.1} parent=1 // pred_region
      %60 = dma.done [#allocation5], 16
    $region29: #{model_forward.1} parent=1 // pred_fallthru
      _
    // Predicated region
    $region30: #{model_forward.1} parent=1 // pred_check
      _
    $region31: #{model_forward.1} parent=1 // pred_check_branch
      %62 = sbr.rel (0) target = $region33
    $region32: #{model_forward.1} parent=1 // pred_region
      %63 = dma.done [#allocation5], 16
    $region33: #{model_forward.1} parent=1 // pred_fallthru
      _
    // Predicated region
    $region34: #{model_forward.1} parent=1 // pred_check
      _
    $region35: #{model_forward.1} parent=1 // pred_check_branch
      %65 = sbr.rel (0) target = $region37
    $region36: #{model_forward.1} parent=1 // pred_region
      %66 = dma.done [#allocation8], 16
    $region37: #{model_forward.1} parent=1 // pred_fallthru
      _
    %67 = sfence
    %v68 = vld [vmem:[%s4] sm:$0xff]
    %s69 = scalar_lea.vmem %s4, 8
    %v70 = vld [vmem:[%s69] sm:$0xff]
    %s71 = scalar_lea.vmem %s4, 16
    %v72 = vld [vmem:[%s71] sm:$0xff]
    %s73 = sld [smem:[#allocation2]]
    %v74 = vstv %s73
    %v75 = vmul.f32 %v74, %v68
    %s76 = sld [smem:[#allocation2 + $0x1]]
    %v77 = vstv %s76
    %v78 = vmul.f32 %v77, %v70
    %v79 = vadd.f32 %v75, %v78
    %s80 = sld [smem:[#allocation2 + $0x2]]
    %v81 = vstv %s80
    %v82 = vmul.f32 %v81, %v72
    %v83 = vadd.f32 %v79, %v82
    %s84 = sld [smem:[#allocation4]]
    %v85 = vstv %s84
    %v86 = vadd.f32 %v83, %v85
    %s87 = sld [smem:[#allocation2 + $0x3]]
    %v88 = vstv %s87
    %v89 = vmul.f32 %v88, %v68
    %s90 = sld [smem:[#allocation2 + $0x4]]
    %v91 = vstv %s90
    %v92 = vmul.f32 %v91, %v70
    %v93 = vadd.f32 %v89, %v92
    %s94 = sld [smem:[#allocation2 + $0x5]]
    %v95 = vstv %s94
    %v96 = vmul.f32 %v95, %v72
    %v97 = vadd.f32 %v93, %v96
    %s98 = sld [smem:[#allocation4 + $0x1]]
    %v99 = vstv %s98
    %v100 = vadd.f32 %v97, %v99
    %s101 = sld [smem:[#allocation2 + $0x6]]
    %v102 = vstv %s101
    %v103 = vmul.f32 %v102, %v68
    %s104 = sld [smem:[#allocation2 + $0x7]]
    %v105 = vstv %s104
    %v106 = vmul.f32 %v105, %v70
    %v107 = vadd.f32 %v103, %v106
    %s108 = sld [smem:[#allocation2 + $0x8]]
    %v109 = vstv %s108
    %v110 = vmul.f32 %v109, %v72
    %v111 = vadd.f32 %v107, %v110
    %s112 = sld [smem:[#allocation4 + $0x2]]
    %v113 = vstv %s112
    %v114 = vadd.f32 %v111, %v113
    %s115 = sld [smem:[#allocation2 + $0x9]]
    %v116 = vstv %s115
    %v117 = vmul.f32 %v116, %v68
    %s118 = sld [smem:[#allocation2 + $0xa]]
    %v119 = vstv %s118
    %v120 = vmul.f32 %v119, %v70
    %v121 = vadd.f32 %v117, %v120
    %s122 = sld [smem:[#allocation2 + $0xb]]
    %v123 = vstv %s122
    %v124 = vmul.f32 %v123, %v72
    %v125 = vadd.f32 %v121, %v124
    %s126 = sld [smem:[#allocation4 + $0x3]]
    %v127 = vstv %s126
    %v128 = vadd.f32 %v125, %v127
    %v129 = vmul.f32 %v86, %v86
    %v130 = vmul.f32 %v100, %v100
    %v131 = vadd.f32 %v129, %v130
    %v132 = vmul.f32 %v114, %v114
    %v133 = vadd.f32 %v131, %v132
    %v134 = vmul.f32 %v128, %v128
    %v135 = vadd.f32 %v133, %v134
    %v136 = vadd.f32 %v135, 4e-05
    %v137 = vrsqrt.pop %v136
    %s138 = sld [smem:[#allocation6]]
    %v139 = vstv %s138
    %v140 = vmul.f32 %v137, %v139
    %v141 = vmul.f32 %v86, %v140
    %s142 = sld [smem:[#allocation7]]
    %v143 = vstv %s142
    %v144 = vadd.f32 %v141, %v143
    %v145 = vtanh.pop %v144
    %146 = vst [vmem:[%s5] sm:$0xff] %v145
    %s147 = sld [smem:[#allocation6 + $0x1]]
    %v148 = vstv %s147
    %v149 = vmul.f32 %v137, %v148
    %v150 = vmul.f32 %v100, %v149
    %s151 = sld [smem:[#allocation7 + $0x1]]
    %v152 = vstv %s151
    %v153 = vadd.f32 %v150, %v152
    %v154 = vtanh.pop %v153
    %s155 = scalar_lea.vmem %s5, 8
    %156 = vst [vmem:[%s155] sm:$0xff] %v154
    %s157 = sld [smem:[#allocation6 + $0x2]]
    %v158 = vstv %s157
    %v159 = vmul.f32 %v137, %v158
    %v160 = vmul.f32 %v114, %v159
    %s161 = sld [smem:[#allocation7 + $0x2]]
    %v162 = vstv %s161
    %v163 = vadd.f32 %v160, %v162
    %v164 = vtanh.pop %v163
    %s165 = scalar_lea.vmem %s5, 16
    %166 = vst [vmem:[%s165] sm:$0xff] %v164
    %s167 = sld [smem:[#allocation6 + $0x3]]
    %v168 = vstv %s167
    %v169 = vmul.f32 %v137, %v168
    %v170 = vmul.f32 %v128, %v169
    %s171 = sld [smem:[#allocation7 + $0x3]]
    %v172 = vstv %s171
    %v173 = vadd.f32 %v170, %v172
    %v174 = vtanh.pop %v173
    %s175 = scalar_lea.vmem %s5, 24
    %176 = vst [vmem:[%s175] sm:$0xff] %v174
    // Predicated region
    $region38: #{model_forward.1} parent=1 // pred_check
      _
    $region39: #{model_forward.1} parent=1 // pred_check_branch
      %178 = sbr.rel (0) target = $region41
    $region40: #{model_forward.1} parent=1 // pred_region
      _
    $region41: #{model_forward.1} parent=1 // pred_fallthru
      _
    // Predicated region
    $region42: #{model_forward.1} parent=1 // pred_check
      _
    $region43: #{model_forward.1} parent=1 // pred_check_branch
      %180 = sbr.rel (0) target = $region45
    $region44: #{model_forward.1} parent=1 // pred_region
      _
    $region45: #{model_forward.1} parent=1 // pred_fallthru
      _
    %181 = vsyncpa [#allocation3], 1
    %182 = vsyncpa [#allocation5], 1
    %183 = vsyncpa [#allocation8], 1

</llo_original>
